<compile_context>
chip_gen: v6e
topology: v6e:2x2x1
jax: 0.10.0
libtpu: 0.0.40
codegen_flags: <defaults>
</compile_context>

<pallas_src>
from functools import partial

import jax
import jax.numpy as jnp
from jax.experimental import pallas as pl
from jax.experimental.pallas import tpu as pltpu


def se_block_kernel(x_ref, w1_ref, w2_ref, o_ref, *, inv_spatial):
    # x_ref: (TB, C, L_pad) tile for the current batch slice, in the input dtype.

    # --- squeeze: global average pool == sum over the (zero-padded) lane axis
    #     divided by the true spatial size; f32 accumulation, no f32 tile copy.
    y = jnp.sum(x_ref[...], axis=-1, dtype=jnp.float32) * inv_spatial     # (TB, C)

    # --- excitation: Linear(C -> C/r, no bias) -> ReLU
    #                 -> Linear(C/r -> C, no bias) -> Sigmoid (all f32) ------
    h = jnp.maximum(
        jnp.dot(y, w1_ref[...].astype(jnp.float32),
                preferred_element_type=jnp.float32), 0.0)                 # (TB, C/r)
    s = jax.nn.sigmoid(
        jnp.dot(h, w2_ref[...].astype(jnp.float32),
                preferred_element_type=jnp.float32))                      # (TB, C)

    # --- scale: re-read the VMEM-resident tile (cheap vld, short live ranges)
    #     and broadcast the gate over the spatial axis in the native dtype. ---
    o_ref[...] = (x_ref[...] * s.astype(x_ref.dtype)[:, :, None]).astype(o_ref.dtype)


def _vmem_capacity_bytes():
    """Physical VMEM of the current TPU generation; conservative v7x fallback."""
    try:
        cap = getattr(pltpu.get_tpu_info(), "vmem_capacity_bytes", None)
        if cap:
            return int(cap)
    except Exception:
        pass
    return 64 * 1024 * 1024


def _pick_batch_tile(B, per_batch_bytes, tile_budget_bytes,
                     *, byte_target=4 << 20, min_steps=8):
    """Batch-tile size TB: biggest tile up to ~byte_target that (a) fits the
    double-buffered VMEM budget, (b) leaves at least min(B, min_steps) grid
    steps (pipeline overlap + >=4 steps per v7x TensorCore), (c) divides B."""
    tb_vmem = max(1, tile_budget_bytes // (4 * per_batch_bytes))   # 2x in + 2x out
    tb_bytes = max(1, byte_target // per_batch_bytes)
    tb = min(B, tb_vmem, tb_bytes)
    desired_steps = min(B, min_steps)
    tb = min(tb, max(1, B // desired_steps))
    tb = max(tb, 1)
    while tb > 1 and B % tb != 0:
        tb -= 1
    return tb


def se_block(x, w1, w2):
    """SE_Block forward.

    x : (B, C, H, W)   feature map (NCHW, as in PyTorch)
    w1: (C, C // r)    first Linear weight, pre-transposed to (in, out), bias-free
    w2: (C // r, C)    second Linear weight, pre-transposed to (in, out), bias-free
    """
    B, C, H, W = x.shape
    L = H * W
    Cr = w1.shape[1]
    assert w1.shape == (C, Cr) and w2.shape == (Cr, C)

    # Lane-dense layout: pad the flattened spatial axis up to a multiple of 128
    # so stores are unmasked vst (padding is zeros; the kernel divides by L).
    L_pad = max(128, ((L + 127) // 128) * 128)
    x3 = x.reshape(B, C, L)
    if L_pad != L:
        x3 = jnp.pad(x3, ((0, 0), (0, 0), (0, L_pad - L)))

    itemsize = jnp.dtype(x.dtype).itemsize
    per_batch_bytes = C * L_pad * itemsize
    weights_bytes = (w1.size * jnp.dtype(w1.dtype).itemsize
                     + w2.size * jnp.dtype(w2.dtype).itemsize)

    cap = _vmem_capacity_bytes()                 # 128 MiB v5e/v6e, 64 MiB v7x
    budget = int(0.75 * cap)                     # ~96 MiB / ~48 MiB
    tile_budget = budget - weights_bytes - (4 << 20)
    if 4 * per_batch_bytes > tile_budget:
        # TODO(synk): L-tiled two-pass accumulate path for huge C*H*W SE sites.
        raise NotImplementedError(
            "SE_Block: one batch element's tile exceeds the VMEM budget; "
            "L-tiled path not implemented")

    tb = _pick_batch_tile(B, per_batch_bytes, tile_budget)
    grid = (B // tb,)
    tile_bytes = tb * per_batch_bytes
    vmem_limit = int(min(budget,
                         max(16 << 20, 4 * tile_bytes + weights_bytes + (4 << 20))))

    out = pl.pallas_call(
        partial(se_block_kernel, inv_spatial=1.0 / float(L)),
        out_shape=jax.ShapeDtypeStruct((B, C, L_pad), x.dtype),
        grid_spec=pltpu.PrefetchScalarGridSpec(
            num_scalar_prefetch=0,
            grid=grid,
            in_specs=[
                pl.BlockSpec((tb, C, L_pad), lambda b: (b, 0, 0)),
                # Constant index_maps keep the tiny weights VMEM-resident
                # across all grid steps (no re-DMA).
                pl.BlockSpec((C, Cr), lambda b: (0, 0)),
                pl.BlockSpec((Cr, C), lambda b: (0, 0)),
            ],
            out_specs=pl.BlockSpec((tb, C, L_pad), lambda b: (b, 0, 0)),
        ),
        compiler_params=pltpu.CompilerParams(
            dimension_semantics=("parallel",),
            vmem_limit_bytes=vmem_limit,
        ),
    )(x3, w1, w2)

    if L_pad != L:
        out = out[:, :, :L]
    return out.reshape(B, C, H, W)


def se_block_reference(x, w1, w2):
    y = jnp.mean(x.astype(jnp.float32), axis=(2, 3))         # (B, C)
    h = jnp.maximum(y @ w1.astype(jnp.float32), 0.0)         # (B, C/r)
    s = jax.nn.sigmoid(h @ w2.astype(jnp.float32))           # (B, C)
    return (x.astype(jnp.float32) * s[:, :, None, None]).astype(x.dtype)


if __name__ == "__main__":
    key = jax.random.PRNGKey(0)
    r = 16

    # --- test 1: first SE site of SEACDNetV2 (SE_Block(c=ch_config[3]=64, r=16)),
    #     f32 activations, lane-dense spatial map (H*W = 128). -----------------
    B, C, Hs, Ws = 8, 64, 8, 16
    Cr = C // r
    kx, k1, k2, krest = jax.random.split(key, 4)
    x = jax.random.normal(kx, (B, C, Hs, Ws), dtype=jnp.float32)
    # PyTorch Linear weights transposed to (in, out); bias=False as in SE_Block.
    w1 = jax.random.normal(k1, (C, Cr), dtype=jnp.float32) * (1.0 / jnp.sqrt(C))
    w2 = jax.random.normal(k2, (Cr, C), dtype=jnp.float32) * (1.0 / jnp.sqrt(Cr))

    out = jax.block_until_ready(se_block(x, w1, w2))
    ref = se_block_reference(x, w1, w2)
    assert out.shape == x.shape
    assert jnp.allclose(out, ref, atol=1e-5, rtol=1e-5), "f32 mismatch vs reference"

    # --- test 2: bf16 activations and a non-multiple-of-128 spatial map (7x7),
    #     exercising the lane-padding path of a later SE site (c=128). ---------
    B2, C2 = 4, 128
    Cr2 = C2 // r
    k3, k4, k5 = jax.random.split(krest, 3)
    x2 = jax.random.normal(k3, (B2, C2, 7, 7), dtype=jnp.bfloat16)
    w1b = jax.random.normal(k4, (C2, Cr2), dtype=jnp.float32) * (1.0 / jnp.sqrt(C2))
    w2b = jax.random.normal(k5, (Cr2, C2), dtype=jnp.float32) * (1.0 / jnp.sqrt(Cr2))

    out2 = jax.block_until_ready(se_block(x2, w1b, w2b))
    ref2 = se_block_reference(x2, w1b, w2b)
    assert out2.shape == x2.shape
    assert jnp.allclose(out2.astype(jnp.float32), ref2.astype(jnp.float32),
                        atol=1e-2, rtol=2e-2), "bf16 mismatch vs reference"

    print("KERNEL_OK")
</pallas_src>

<mosaic_0001>
module attributes {stable_mosaic.version = 11 : i64} {
  func.func @se_block_kernel(%arg0: i32, %arg1: memref<1x64x128xf32, #tpu.memory_space<vmem>>, %arg2: memref<64x4xf32, #tpu.memory_space<vmem>>, %arg3: memref<4x64xf32, #tpu.memory_space<vmem>>, %arg4: memref<1x64x128xf32, #tpu.memory_space<vmem>>) attributes {dimension_semantics = [#tpu.dimension_semantics<parallel>], iteration_bounds = array<i64: 8>, scalar_prefetch = 0 : i64, scratch_operands = 0 : i64, tpu.core_type = #tpu.core_type<tc>, window_params = [{transform_indices = @transform_0, window_bounds = array<i64: 1, 64, 128>}, {pipeline_mode = #tpu.pipeline_mode<synchronous>, transform_indices = @transform_1, window_bounds = array<i64: 64, 4>}, {pipeline_mode = #tpu.pipeline_mode<synchronous>, transform_indices = @transform_2, window_bounds = array<i64: 4, 64>}, {transform_indices = @transform_3, window_bounds = array<i64: 1, 64, 128>}]} {
    %c0 = arith.constant 0 : index
    %c0_0 = arith.constant 0 : index
    %c0_1 = arith.constant 0 : index
    %0 = vector.load %arg1[%c0, %c0_0, %c0_1] : memref<1x64x128xf32, #tpu.memory_space<vmem>>, vector<1x64x128xf32>
    %cst = arith.constant dense<0.000000e+00> : vector<1x64xf32>
    %1 = vector.multi_reduction <add>, %0, %cst [2] : vector<1x64x128xf32> to vector<1x64xf32>
    %cst_2 = arith.constant 7.812500e-03 : f32
    %2 = vector.broadcast %cst_2 : f32 to vector<1x64xf32>
    %3 = arith.mulf %1, %2 : vector<1x64xf32>
    %c0_3 = arith.constant 0 : index
    %c0_4 = arith.constant 0 : index
    %4 = vector.load %arg2[%c0_3, %c0_4] : memref<64x4xf32, #tpu.memory_space<vmem>>, vector<64x4xf32>
    %cst_5 = arith.constant dense<0.000000e+00> : vector<1x4xf32>
    %5 = tpu.matmul %3, %4, %cst_5 {dimension_numbers = #tpu.dot_dimension_numbers<[1], [0], [0], [1], [0, 0, 1, 1], [], []>} : vector<1x64xf32>, vector<64x4xf32>, vector<1x4xf32> -> vector<1x4xf32>
    %cst_6 = arith.constant 0.000000e+00 : f32
    %6 = vector.broadcast %cst_6 : f32 to vector<1x4xf32>
    %7 = arith.maximumf %5, %6 : vector<1x4xf32>
    %c0_7 = arith.constant 0 : index
    %c0_8 = arith.constant 0 : index
    %8 = vector.load %arg3[%c0_7, %c0_8] : memref<4x64xf32, #tpu.memory_space<vmem>>, vector<4x64xf32>
    %cst_9 = arith.constant dense<0.000000e+00> : vector<1x64xf32>
    %9 = tpu.matmul %7, %8, %cst_9 {dimension_numbers = #tpu.dot_dimension_numbers<[1], [0], [0], [1], [0, 0, 1, 1], [], []>} : vector<1x4xf32>, vector<4x64xf32>, vector<1x64xf32> -> vector<1x64xf32>
    %10 = arith.negf %9 : vector<1x64xf32>
    %11 = math.exp %10 : vector<1x64xf32>
    %cst_10 = arith.constant 1.000000e+00 : f32
    %12 = vector.broadcast %cst_10 : f32 to vector<1x64xf32>
    %13 = arith.addf %12, %11 : vector<1x64xf32>
    %14 = arith.divf %12, %13 : vector<1x64xf32>
    %c0_11 = arith.constant 0 : index
    %c0_12 = arith.constant 0 : index
    %c0_13 = arith.constant 0 : index
    %15 = vector.load %arg1[%c0_11, %c0_12, %c0_13] : memref<1x64x128xf32, #tpu.memory_space<vmem>>, vector<1x64x128xf32>
    %16 = vector.shape_cast %14 : vector<1x64xf32> to vector<1x64x1xf32>
    %17 = vector.broadcast %16 : vector<1x64x1xf32> to vector<1x64x128xf32>
    %18 = arith.mulf %15, %17 : vector<1x64x128xf32>
    %c0_14 = arith.constant 0 : index
    %c0_15 = arith.constant 0 : index
    %c0_16 = arith.constant 0 : index
    %19 = vector.load %arg4[%c0_14, %c0_15, %c0_16] : memref<1x64x128xf32, #tpu.memory_space<vmem>>, vector<1x64x128xf32>
    tpu.vector_store %arg4[%c0_14, %c0_15, %c0_16], %18 {strides = array<i32>} : memref<1x64x128xf32, #tpu.memory_space<vmem>>, vector<1x64x128xf32>,
    return
  }
  func.func @transform_0(%arg0: i32) -> (i32, i32, i32) {
    %c0_i32 = arith.constant 0 : i32
    %c0_i32_0 = arith.constant 0 : i32
    %c0_i32_1 = arith.constant 0 : i32
    return %arg0, %c0_i32, %c0_i32_0 : i32, i32, i32
  }
  func.func @transform_1(%arg0: i32) -> (i32, i32) {
    %c0_i32 = arith.constant 0 : i32
    %c0_i32_0 = arith.constant 0 : i32
    %c0_i32_1 = arith.constant 0 : i32
    return %c0_i32, %c0_i32_0 : i32, i32
  }
  func.func @transform_2(%arg0: i32) -> (i32, i32) {
    %c0_i32 = arith.constant 0 : i32
    %c0_i32_0 = arith.constant 0 : i32
    %c0_i32_1 = arith.constant 0 : i32
    return %c0_i32, %c0_i32_0 : i32, i32
  }
  func.func @transform_3(%arg0: i32) -> (i32, i32, i32) {
    %c0_i32 = arith.constant 0 : i32
    %c0_i32_0 = arith.constant 0 : i32
    %c0_i32_1 = arith.constant 0 : i32
    return %arg0, %c0_i32, %c0_i32_0 : i32, i32, i32
  }
}

</mosaic_0001>

<llo_original>
// kernel: tpu_custom_call.1
$region0: #{tpu_custom_call.1}
  #allocation0 [shape = 'u32[]', space=smem, size = 0x4, offset = 0x4, fixed_abs, tag = 'smem constant byte address 0x4 - core index']
  #allocation1 [shape = 'u32[144,128]{1,0:T(1,128)}', space=vmem, size = 0x12000, scoped, tag = 'internal scratch']
  %s0 = inlined_call_operand.hbm [shape: f32[8,64,128], index: 0, kind: input, shape index: {}]
  %s1 = inlined_call_operand.vmem [shape: f32[64,4], index: 1, kind: input, shape index: {}]
  %s2 = inlined_call_operand.vmem [shape: f32[4,64], index: 2, kind: input, shape index: {}]
  %s3 = inlined_call_operand.hbm [shape: f32[8,64,128], index: 3, kind: output, shape index: {}]
  %s4 = sld [smem:[#allocation0]]
  $region49: #{tpu_custom_call.1} parent=0
    _
  %s6 = ssub.s32 1, %s4
  %s7 = scalar_select 0, %s6, %s4
  $region1: #{tpu_custom_call.1} parent=0
    #allocation2 [shape = 'u8[65536]{0}', space=vmem, size = 0x10000, scoped, tag = 'input window, operand 0']
    #allocation3 [shape = 's32[2]{0}', space=sflag, size = 0x8, scoped, tag = 'scoped memory for tpu_custom_call.1']
    #allocation4 [shape = 's32[2]{0}', space=sflag, size = 0x8, scoped, tag = 'scoped memory for tpu_custom_call.1']
    #allocation5 [shape = 'u8[65536]{0}', space=vmem, size = 0x10000, scoped, tag = 'output window, operand 0']
    %8 = vsyncpa [#allocation3], 0
    %s9 = scalar_lea.sflag [#allocation3], 1
    %10 = vsyncpa %s9, 0
    %11 = vsyncpa [#allocation4], 0
    %s12 = scalar_lea.sflag [#allocation4], 1
    %13 = vsyncpa %s12, 0
    loop: start=0, step=1, limit=10
    $region2: #{tpu_custom_call.1} parent=1 // loop_pre_header
      _
    $region3: #{tpu_custom_call.1} parent=1 // loop_header
      %s15 = sphi 0, %s19
      %p16 = scmp.ge.s32.totalorder %s15, 10
      %s25 = sphi 0, %s27
      %s28 = sphi 0, %s25
      %s29 = sphi 0, %s28
      %s45 = sphi 0, %s29
      %s49 = sphi 0, %s49
      %s51 = sphi 0, %s49
      %s52 = sphi 0, %s51
      %s66 = sphi 0, %s52
      %s70 = sphi 0, %s70
      %s72 = sphi 0, %s70
      %s73 = sphi 0, %s72
      %s87 = sphi 0, %s73
      %s93 = sphi 0, %s95
      %s96 = sphi 0, %s93
      %s97 = sphi 0, %s96
      %s113 = sphi 0, %s97
    $region4: #{tpu_custom_call.1} parent=1 // loop_header_branch
      %18 = sbr.rel (%p16) target = $region8
    $region5: #{tpu_custom_call.1} parent=1 // loop_body
      %s20 = ssub.s32 %s15, 1
      %s21 = ssub.s32 %s15, 2
      %s22 = sadd.s32 %s15, 1
      %s23 = ssub.s32 %s15, %s22
      %p24 = scmp.eq.s32.totalorder %s23, 0
      %s26 = sadd.s32 %s25, 1
      %s27 = scalar_select %p24, %s25, %s26
      %p30 = pneg %p24
      %p31 = scmp.eq.s32.totalorder %s15, 7
      %p32 = por %p30, %p31
      %p33 = scmp.ne.s32.totalorder %s25, %s28
      %p34 = scmp.eq.s32.totalorder %s15, 0
      %p35 = por %p33, %p34
      %p36 = scmp.ne.s32.totalorder %s25, %s28
      %p37 = scmp.eq.s32.totalorder %s20, 7
      %p38 = por %p36, %p37
      %p39 = scmp.ne.s32.totalorder %s28, %s29
      %p40 = scmp.eq.s32.totalorder %s20, 0
      %p41 = por %p39, %p40
      %p42 = scmp.ne.s32.totalorder %s28, %s29
      %p43 = scmp.eq.s32.totalorder %s21, 7
      %p44 = por %p42, %p43
      %p46 = scmp.ne.s32.totalorder %s29, %s45
      %p47 = scmp.eq.s32.totalorder %s21, 0
      %p48 = por %p46, %p47
      %s50 = sadd.s32 %s49, 1
      %p53 = scmp.eq.s32.totalorder %s15, 7
      %p54 = scmp.ne.s32.totalorder %s49, %s51
      %p55 = scmp.eq.s32.totalorder %s15, 0
      %p56 = por %p54, %p55
      %p57 = scmp.ne.s32.totalorder %s49, %s51
      %p58 = scmp.eq.s32.totalorder %s20, 7
      %p59 = por %p57, %p58
      %p60 = scmp.ne.s32.totalorder %s51, %s52
      %p61 = scmp.eq.s32.totalorder %s20, 0
      %p62 = por %p60, %p61
      %p63 = scmp.ne.s32.totalorder %s51, %s52
      %p64 = scmp.eq.s32.totalorder %s21, 7
      %p65 = por %p63, %p64
      %p67 = scmp.ne.s32.totalorder %s52, %s66
      %p68 = scmp.eq.s32.totalorder %s21, 0
      %p69 = por %p67, %p68
      %s71 = sadd.s32 %s70, 1
      %p74 = scmp.eq.s32.totalorder %s15, 7
      %p75 = scmp.ne.s32.totalorder %s70, %s72
      %p76 = scmp.eq.s32.totalorder %s15, 0
      %p77 = por %p75, %p76
      %p78 = scmp.ne.s32.totalorder %s70, %s72
      %p79 = scmp.eq.s32.totalorder %s20, 7
      %p80 = por %p78, %p79
      %p81 = scmp.ne.s32.totalorder %s72, %s73
      %p82 = scmp.eq.s32.totalorder %s20, 0
      %p83 = por %p81, %p82
      %p84 = scmp.ne.s32.totalorder %s72, %s73
      %p85 = scmp.eq.s32.totalorder %s21, 7
      %p86 = por %p84, %p85
      %p88 = scmp.ne.s32.totalorder %s73, %s87
      %p89 = scmp.eq.s32.totalorder %s21, 0
      %p90 = por %p88, %p89
      %s91 = ssub.s32 %s15, %s22
      %p92 = scmp.eq.s32.totalorder %s91, 0
      %s94 = sadd.s32 %s93, 1
      %s95 = scalar_select %p92, %s93, %s94
      %p98 = pneg %p92
      %p99 = scmp.eq.s32.totalorder %s15, 7
      %p100 = por %p98, %p99
      %p101 = scmp.ne.s32.totalorder %s93, %s96
      %p102 = scmp.eq.s32.totalorder %s15, 0
      %p103 = por %p101, %p102
      %p104 = scmp.ne.s32.totalorder %s93, %s96
      %p105 = scmp.eq.s32.totalorder %s20, 7
      %p106 = por %p104, %p105
      %p107 = scmp.ne.s32.totalorder %s96, %s97
      %p108 = scmp.eq.s32.totalorder %s20, 0
      %p109 = por %p107, %p108
      %p110 = scmp.ne.s32.totalorder %s96, %s97
      %p111 = scmp.eq.s32.totalorder %s21, 7
      %p112 = por %p110, %p111
      %p114 = scmp.ne.s32.totalorder %s97, %s113
      %p115 = scmp.eq.s32.totalorder %s21, 0
      %p116 = por %p114, %p115
      %p117 = scmp.le.s32.totalorder 1, %s15
      %p118 = scmp.lt.s32.totalorder %s15, 9
      %p119 = pnand %p117, %p118
      %p120 = pneg %p119
      // Predicated region
      $region9: #{tpu_custom_call.1} parent=5 // pred_check
        _
      $region10: #{tpu_custom_call.1} parent=5 // pred_check_branch
        %122 = sbr.rel (%p119) target = $region12
      $region11: #{tpu_custom_call.1} parent=5 // pred_region
        %s123 = ssub.s32 %s15, 1
        // Predicated region
        $region13: #{tpu_custom_call.1} parent=11 // pred_check
          %p124 = pneg %p62
        $region14: #{tpu_custom_call.1} parent=11 // pred_check_branch
          %126 = sbr.rel (%p124) target = $region16
        $region15: #{tpu_custom_call.1} parent=11 // pred_region
          _
        $region16: #{tpu_custom_call.1} parent=11 // pred_fallthru
          _
        // Predicated region
        $region17: #{tpu_custom_call.1} parent=11 // pred_check
          %p127 = pneg %p83
        $region18: #{tpu_custom_call.1} parent=11 // pred_check_branch
          %129 = sbr.rel (%p127) target = $region20
        $region19: #{tpu_custom_call.1} parent=11 // pred_region
          _
        $region20: #{tpu_custom_call.1} parent=11 // pred_fallthru
          _
      $region12: #{tpu_custom_call.1} parent=5 // pred_fallthru
        _
      %p130 = scmp.lt.s32.totalorder %s15, 8
      // Predicated region
      $region21: #{tpu_custom_call.1} parent=5 // pred_check
        %p131 = pneg %p130
      $region22: #{tpu_custom_call.1} parent=5 // pred_check_branch
        %133 = sbr.rel (%p131) target = $region24
      $region23: #{tpu_custom_call.1} parent=5 // pred_region
        // Predicated region
        $region25: #{tpu_custom_call.1} parent=23 // pred_check
          %p134 = pneg %p35
        $region26: #{tpu_custom_call.1} parent=23 // pred_check_branch
          %136 = sbr.rel (%p134) target = $region28
        $region27: #{tpu_custom_call.1} parent=23 // pred_region
          %s137 = sand.u32 %s25, 1
          %s138 = scalar_lea.sflag [#allocation3], %s137
          %s139 = sand.u32 %s25, 1
          %s140 = smul.addr %s139, 64
          %s141 = scalar_lea.vmem [#allocation2], %s140
          %s143 = ssub.s32 1024, 1024
          %144 = vsyncadd %s138, %s143
          %s145 = smul.addr %s15, 8
          %s146 = smul.addr %s145, 128
          %s147 = scalar_lea.hbm %s0, %s146
          %s148 = sshll.u32 %s141, 4
          %s149 = int_to_ptr.vmem [resolvable:$true] %s148
          %154 = dma.hbm_to_vmem [thread:$0]  %s147, 1024, %s149, %s138, 128, 128, 8
        $region28: #{tpu_custom_call.1} parent=23 // pred_fallthru
          _
      $region24: #{tpu_custom_call.1} parent=5 // pred_fallthru
        _
      %p155 = scmp.le.s32.totalorder 1, %s15
      %p156 = scmp.lt.s32.totalorder %s15, 9
      %p157 = pnand %p155, %p156
      %p158 = pneg %p157
      // Predicated region
      $region29: #{tpu_custom_call.1} parent=5 // pred_check
        _
      $region30: #{tpu_custom_call.1} parent=5 // pred_check_branch
        %160 = sbr.rel (%p157) target = $region32
      $region31: #{tpu_custom_call.1} parent=5 // pred_region
        %s161 = ssub.s32 %s15, 1
        %s162 = sand.u32 %s28, 1
        %s163 = scalar_lea.sflag [#allocation3], %s162
        %s164 = sand.u32 %s28, 1
        %s165 = smul.addr %s164, 64
        %s166 = scalar_lea.vmem [#allocation2], %s165
        // Predicated region
        $region33: #{tpu_custom_call.1} parent=31 // pred_check
          %p167 = pneg %p41
        $region34: #{tpu_custom_call.1} parent=31 // pred_check_branch
          %169 = sbr.rel (%p167) target = $region36
        $region35: #{tpu_custom_call.1} parent=31 // pred_region
          %170 = dma.done %s163, 1024
        $region36: #{tpu_custom_call.1} parent=31 // pred_fallthru
          _
        %s171 = sand.u32 %s28, 1
        %s172 = scalar_lea.sflag [#allocation3], %s171
        %s173 = sand.u32 %s28, 1
        %s174 = smul.addr %s173, 64
        %s175 = scalar_lea.vmem [#allocation2], %s174
        %p176 = pneg %p41
        %p177 = pneg %p38
        %p178 = pneg %p62
        %p179 = pneg %p59
        %p180 = pneg %p83
        %p181 = pneg %p80
        %p182 = pneg %p109
        %p183 = pneg %p106
        %s184 = sand.u32 %s96, 1
        %s185 = scalar_lea.sflag [#allocation4], %s184
        %s186 = sand.u32 %s96, 1
        %s187 = smul.addr %s186, 64
        %s188 = scalar_lea.vmem [#allocation5], %s187
        %v189 = vld [vmem:[%s166] sm:$0xff]
        %v190 = vld [vmem:[%s166 + $0x8] sm:$0xff]
        %v191 = vld [vmem:[%s166 + $0x10] sm:$0xff]
        %v192 = vld [vmem:[%s166 + $0x18] sm:$0xff]
        %v193 = vld [vmem:[%s166 + $0x20] sm:$0xff]
        %v194 = vld [vmem:[%s166 + $0x28] sm:$0xff]
        %v195 = vld [vmem:[%s166 + $0x30] sm:$0xff]
        %v196 = vld [vmem:[%s166 + $0x38] sm:$0xff]
        %197 = vadd.xlane.f32.xlu0 %v189
        %v198 = vpop.xlane.xlu0 %197
        %199 = vadd.xlane.f32.xlu0 %v190
        %v200 = vpop.xlane.xlu0 %199
        %201 = vadd.xlane.f32.xlu0 %v191
        %v202 = vpop.xlane.xlu0 %201
        %203 = vadd.xlane.f32.xlu0 %v192
        %v204 = vpop.xlane.xlu0 %203
        %205 = vadd.xlane.f32.xlu0 %v193
        %v206 = vpop.xlane.xlu0 %205
        %207 = vadd.xlane.f32.xlu0 %v194
        %v208 = vpop.xlane.xlu0 %207
        %209 = vadd.xlane.f32.xlu0 %v195
        %v210 = vpop.xlane.xlu0 %209
        %211 = vadd.xlane.f32.xlu0 %v196
        %v212 = vpop.xlane.xlu0 %211
        %v213 = vmul.f32 %v198, 0.0078125
        %v214 = vmul.f32 %v200, 0.0078125
        %v215 = vmul.f32 %v202, 0.0078125
        %v216 = vmul.f32 %v204, 0.0078125
        %v217 = vmul.f32 %v206, 0.0078125
        %v218 = vmul.f32 %v208, 0.0078125
        %v219 = vmul.f32 %v210, 0.0078125
        %v220 = vmul.f32 %v212, 0.0078125
        %v221 = vld [vmem:[%s1] sm:$0xff]
        %v222 = vld [vmem:[%s1 + $0x8] sm:$0xff]
        %v223 = vld [vmem:[%s1 + $0x10] sm:$0xff]
        %v224 = vld [vmem:[%s1 + $0x18] sm:$0xff]
        %v225 = vld [vmem:[%s1 + $0x20] sm:$0xff]
        %v226 = vld [vmem:[%s1 + $0x28] sm:$0xff]
        %v227 = vld [vmem:[%s1 + $0x30] sm:$0xff]
        %v228 = vld [vmem:[%s1 + $0x38] sm:$0xff]
        %v237 = vlaneseq
        %v238 = vand.u32 %v237, 127
        %v239 = vlaneseq
        %v240 = vshrl.u32 %v239, 7
        %v241 = vsub.s32 %v238, %v240
        %v242 = vrot.slane %v213, %v241
        %v243 = vadd.s32 %v238, 4294967288
        %v244 = vlaneseq
        %v245 = vshrl.u32 %v244, 7
        %v246 = vsub.s32 %v243, %v245
        %v247 = vrot.slane %v214, %v246
        %vm248 = vcmask 130112
        %v249 = vsel %vm248, %v247, %v242
        %v250 = vadd.s32 %v238, 4294967280
        %v251 = vlaneseq
        %v252 = vshrl.u32 %v251, 7
        %v253 = vsub.s32 %v250, %v252
        %v254 = vrot.slane %v215, %v253
        %vm255 = vcmask 195712
        %v256 = vsel %vm255, %v254, %v249
        %v257 = vadd.s32 %v238, 4294967272
        %v258 = vlaneseq
        %v259 = vshrl.u32 %v258, 7
        %v260 = vsub.s32 %v257, %v259
        %v261 = vrot.slane %v216, %v260
        %vm262 = vcmask 261312
        %v263 = vsel %vm262, %v261, %v256
        %v264 = vadd.s32 %v238, 4294967264
        %v265 = vlaneseq
        %v266 = vshrl.u32 %v265, 7
        %v267 = vsub.s32 %v264, %v266
        %v268 = vrot.slane %v217, %v267
        %vm269 = vcmask 326912
        %v270 = vsel %vm269, %v268, %v263
        %v271 = vadd.s32 %v238, 4294967256
        %v272 = vlaneseq
        %v273 = vshrl.u32 %v272, 7
        %v274 = vsub.s32 %v271, %v273
        %v275 = vrot.slane %v218, %v274
        %vm276 = vcmask 392512
        %v277 = vsel %vm276, %v275, %v270
        %v278 = vadd.s32 %v238, 4294967248
        %v279 = vlaneseq
        %v280 = vshrl.u32 %v279, 7
        %v281 = vsub.s32 %v278, %v280
        %v282 = vrot.slane %v219, %v281
        %vm283 = vcmask 458112
        %v284 = vsel %vm283, %v282, %v277
        %v285 = vadd.s32 %v238, 4294967240
        %v286 = vlaneseq
        %v287 = vshrl.u32 %v286, 7
        %v288 = vsub.s32 %v285, %v287
        %v289 = vrot.slane %v220, %v288
        %vm290 = vcmask 523712
        %v291 = vsel %vm290, %v289, %v284
        %vm292 = vcmask 523264
        %v293 = vsel %vm292, %v291, 0
        %295 = vmatprep.subr.mxu0 0.0
        %296 = vmatpush1.msra.mxu0 0.0
        %297 = vmatprep.subr.mxu0 0.0
        %298 = vmatpush1.msra.mxu0 0.0
        %299 = vmatprep.subr.mxu0 0.0
        %300 = vmatpush1.msra.mxu0 0.0
        %301 = vmatprep.subr.mxu0 0.0
        %302 = vmatpush1.msra.mxu0 0.0
        %303 = vmatprep.subr.mxu0 0.0
        %304 = vmatpush1.msra.mxu0 0.0
        %305 = vmatprep.subr.mxu0 0.0
        %306 = vmatpush1.msra.mxu0 0.0
        %307 = vmatprep.subr.mxu0 0.0
        %308 = vmatpush1.msra.mxu0 0.0
        %309 = vmatprep.subr.mxu0 0.0
        %310 = vmatpush1.msra.mxu0 0.0
        %311 = vmatprep.subr.mxu0 0.0
        %312 = vmatpush1.msra.mxu0 %v228
        %313 = vmatprep.subr.mxu0 0.0
        %314 = vmatpush1.msra.mxu0 %v227
        %315 = vmatprep.subr.mxu0 0.0
        %316 = vmatpush1.msra.mxu0 %v226
        %317 = vmatprep.subr.mxu0 0.0
        %318 = vmatpush1.msra.mxu0 %v225
        %319 = vmatprep.subr.mxu0 0.0
        %320 = vmatpush1.msra.mxu0 %v224
        %321 = vmatprep.subr.mxu0 0.0
        %322 = vmatpush1.msra.mxu0 %v223
        %323 = vmatprep.subr.mxu0 0.0
        %324 = vmatpush1.msra.mxu0 %v222
        %325 = vmatprep.subr.mxu0 0.0
        %326 = vmatpush1.msra.mxu0 %v221
        %327 = vmatprep.subr.mxu0 0.0
        %328 = vmatpush2.msra.mxu0 0.0
        %329 = vmatprep.subr.mxu0 0.0
        %330 = vmatpush2.msra.mxu0 0.0
        %331 = vmatprep.subr.mxu0 0.0
        %332 = vmatpush2.msra.mxu0 0.0
        %333 = vmatprep.subr.mxu0 0.0
        %334 = vmatpush2.msra.mxu0 0.0
        %335 = vmatprep.subr.mxu0 0.0
        %336 = vmatpush2.msra.mxu0 0.0
        %337 = vmatprep.subr.mxu0 0.0
        %338 = vmatpush2.msra.mxu0 0.0
        %339 = vmatprep.subr.mxu0 0.0
        %340 = vmatpush2.msra.mxu0 0.0
        %341 = vmatprep.subr.mxu0 0.0
        %342 = vmatpush2.msra.mxu0 0.0
        %343 = vmatprep.subr.mxu0 0.0
        %344 = vmatpush2.msra.mxu0 0.0
        %345 = vmatprep.subr.mxu0 0.0
        %346 = vmatpush2.msra.mxu0 0.0
        %347 = vmatprep.subr.mxu0 0.0
        %348 = vmatpush2.msra.mxu0 0.0
        %349 = vmatprep.subr.mxu0 0.0
        %350 = vmatpush2.msra.mxu0 0.0
        %351 = vmatprep.subr.mxu0 0.0
        %352 = vmatpush2.msra.mxu0 0.0
        %353 = vmatprep.subr.mxu0 0.0
        %354 = vmatpush2.msra.mxu0 0.0
        %355 = vmatprep.subr.mxu0 0.0
        %356 = vmatpush2.msra.mxu0 0.0
        %357 = vmatprep.subr.mxu0 0.0
        %358 = vmatpush2.msra.mxu0 0.0
        %359 = vmatprep.mubr.f32.mxu0 0.0
        %360 = vmatmul.mubr.f32.gmra.mxu0 %v293
        %v361 = vpop.f32.mrf.mxu0
        %v362 = vadd.f32 0.0, %v361
        %v363 = vpop.f32.mrf.mxu0
        %364 = vdwg.mxu0
        %v365 = vmax.f32 %v362, 0.0
        %v366 = vld [vmem:[%s2] sm:$0xf]
        %vm367 = vcmask 31744
        %v369 = vsel %vm367, %v365, 0
        %vm371 = vcmask 1043456
        %v373 = vsel %vm371, %v366, 0
        %375 = vmatprep.subr.mxu0 0.0
        %376 = vmatpush1.msra.mxu0 0.0
        %377 = vmatprep.subr.mxu0 0.0
        %378 = vmatpush1.msra.mxu0 0.0
        %379 = vmatprep.subr.mxu0 0.0
        %380 = vmatpush1.msra.mxu0 0.0
        %381 = vmatprep.subr.mxu0 0.0
        %382 = vmatpush1.msra.mxu0 0.0
        %383 = vmatprep.subr.mxu0 0.0
        %384 = vmatpush1.msra.mxu0 0.0
        %385 = vmatprep.subr.mxu0 0.0
        %386 = vmatpush1.msra.mxu0 0.0
        %387 = vmatprep.subr.mxu0 0.0
        %388 = vmatpush1.msra.mxu0 0.0
        %389 = vmatprep.subr.mxu0 0.0
        %390 = vmatpush1.msra.mxu0 0.0
        %391 = vmatprep.subr.mxu0 0.0
        %392 = vmatpush1.msra.mxu0 0.0
        %393 = vmatprep.subr.mxu0 0.0
        %394 = vmatpush1.msra.mxu0 0.0
        %395 = vmatprep.subr.mxu0 0.0
        %396 = vmatpush1.msra.mxu0 0.0
        %397 = vmatprep.subr.mxu0 0.0
        %398 = vmatpush1.msra.mxu0 0.0
        %399 = vmatprep.subr.mxu0 0.0
        %400 = vmatpush1.msra.mxu0 0.0
        %401 = vmatprep.subr.mxu0 0.0
        %402 = vmatpush1.msra.mxu0 0.0
        %403 = vmatprep.subr.mxu0 0.0
        %404 = vmatpush1.msra.mxu0 0.0
        %405 = vmatprep.subr.mxu0 0.0
        %406 = vmatpush1.msra.mxu0 %v373
        %407 = vmatprep.subr.mxu0 0.0
        %408 = vmatpush2.msra.mxu0 0.0
        %409 = vmatprep.subr.mxu0 0.0
        %410 = vmatpush2.msra.mxu0 0.0
        %411 = vmatprep.subr.mxu0 0.0
        %412 = vmatpush2.msra.mxu0 0.0
        %413 = vmatprep.subr.mxu0 0.0
        %414 = vmatpush2.msra.mxu0 0.0
        %415 = vmatprep.subr.mxu0 0.0
        %416 = vmatpush2.msra.mxu0 0.0
        %417 = vmatprep.subr.mxu0 0.0
        %418 = vmatpush2.msra.mxu0 0.0
        %419 = vmatprep.subr.mxu0 0.0
        %420 = vmatpush2.msra.mxu0 0.0
        %421 = vmatprep.subr.mxu0 0.0
        %422 = vmatpush2.msra.mxu0 0.0
        %423 = vmatprep.subr.mxu0 0.0
        %424 = vmatpush2.msra.mxu0 0.0
        %425 = vmatprep.subr.mxu0 0.0
        %426 = vmatpush2.msra.mxu0 0.0
        %427 = vmatprep.subr.mxu0 0.0
        %428 = vmatpush2.msra.mxu0 0.0
        %429 = vmatprep.subr.mxu0 0.0
        %430 = vmatpush2.msra.mxu0 0.0
        %431 = vmatprep.subr.mxu0 0.0
        %432 = vmatpush2.msra.mxu0 0.0
        %433 = vmatprep.subr.mxu0 0.0
        %434 = vmatpush2.msra.mxu0 0.0
        %435 = vmatprep.subr.mxu0 0.0
        %436 = vmatpush2.msra.mxu0 0.0
        %437 = vmatprep.subr.mxu0 0.0
        %438 = vmatpush2.msra.mxu0 0.0
        %439 = vmatprep.mubr.f32.mxu0 0.0
        %440 = vmatmul.mubr.f32.gmra.mxu0 %v369
        %v441 = vpop.f32.mrf.mxu0
        %v442 = vadd.f32 0.0, %v441
        %v443 = vpop.f32.mrf.mxu0
        %444 = vdwg.mxu0
        %v445 = vxor.u32 %v442, 2147483648
        %v446 = vmul.f32 %v445, 1.442695
        %v447 = vpow.pop %v446
        %v448 = vadd.f32 %v447, 1.0
        %v449 = vrcp.pop %v448
        %v450 = vmul.f32 1.0, %v449
        %v451 = vlaneseq
        %v452 = vshrl.u32 %v451, 7
        %v453 = vsub.s32 0, %v452
        %v454 = vrot.slane %v450, %v453
        %456 = vbcast.lane.b32.xlu0 %v454, 256
        %v457 = vpop.permute.xlu0 %456
        %s459 = sor.u32 256, 8
        %460 = vbcast.lane.b32.xlu0 %v454, %s459
        %v461 = vpop.permute.xlu0 %460
        %s463 = sor.u32 256, 16
        %464 = vbcast.lane.b32.xlu0 %v454, %s463
        %v465 = vpop.permute.xlu0 %464
        %s467 = sor.u32 256, 24
        %468 = vbcast.lane.b32.xlu0 %v454, %s467
        %v469 = vpop.permute.xlu0 %468
        %s471 = sor.u32 256, 32
        %472 = vbcast.lane.b32.xlu0 %v454, %s471
        %v473 = vpop.permute.xlu0 %472
        %s475 = sor.u32 256, 40
        %476 = vbcast.lane.b32.xlu0 %v454, %s475
        %v477 = vpop.permute.xlu0 %476
        %s479 = sor.u32 256, 48
        %480 = vbcast.lane.b32.xlu0 %v454, %s479
        %v481 = vpop.permute.xlu0 %480
        %s483 = sor.u32 256, 56
        %484 = vbcast.lane.b32.xlu0 %v454, %s483
        %v485 = vpop.permute.xlu0 %484
        %v486 = vmul.f32 %v189, %v457
        %v487 = vmul.f32 %v190, %v461
        %v488 = vmul.f32 %v191, %v465
        %v489 = vmul.f32 %v192, %v469
        %v490 = vmul.f32 %v193, %v473
        %v491 = vmul.f32 %v194, %v477
        %v492 = vmul.f32 %v195, %v481
        %v493 = vmul.f32 %v196, %v485
        %494 = vst [vmem:[%s188] sm:$0xff] %v486
        %495 = vst [vmem:[%s188 + $0x8] sm:$0xff] %v487
        %496 = vst [vmem:[%s188 + $0x10] sm:$0xff] %v488
        %497 = vst [vmem:[%s188 + $0x18] sm:$0xff] %v489
        %498 = vst [vmem:[%s188 + $0x20] sm:$0xff] %v490
        %499 = vst [vmem:[%s188 + $0x28] sm:$0xff] %v491
        %500 = vst [vmem:[%s188 + $0x30] sm:$0xff] %v492
        %501 = vst [vmem:[%s188 + $0x38] sm:$0xff] %v493
        %s502 = sand.u32 %s96, 1
        %s503 = scalar_lea.sflag [#allocation4], %s502
        %s504 = sand.u32 %s96, 1
        %s505 = smul.addr %s504, 64
        %s506 = scalar_lea.vmem [#allocation5], %s505
        // Predicated region
        $region37: #{tpu_custom_call.1} parent=31 // pred_check
          %p507 = pneg %p106
        $region38: #{tpu_custom_call.1} parent=31 // pred_check_branch
          %509 = sbr.rel (%p507) target = $region40
        $region39: #{tpu_custom_call.1} parent=31 // pred_region
          %s511 = ssub.s32 1024, 1024
          %512 = vsyncadd %s503, %s511
          %s513 = smul.addr %s20, 8
          %s514 = smul.addr %s513, 128
          %s515 = scalar_lea.hbm %s3, %s514
          %s516 = sshll.u32 %s506, 4
          %s517 = int_to_ptr.vmem [resolvable:$true] %s516
          %522 = dma.vmem_to_hbm [thread:$0]  %s517, 1024, %s515, %s503, 128, 128, 8
        $region40: #{tpu_custom_call.1} parent=31 // pred_fallthru
          _
      $region32: #{tpu_custom_call.1} parent=5 // pred_fallthru
        _
      %p523 = scmp.le.s32.totalorder 2, %s15
      // Predicated region
      $region41: #{tpu_custom_call.1} parent=5 // pred_check
        %p524 = pneg %p523
      $region42: #{tpu_custom_call.1} parent=5 // pred_check_branch
        %526 = sbr.rel (%p524) target = $region44
      $region43: #{tpu_custom_call.1} parent=5 // pred_region
        %s527 = ssub.s32 %s15, 2
        // Predicated region
        $region45: #{tpu_custom_call.1} parent=43 // pred_check
          %p528 = pneg %p112
        $region46: #{tpu_custom_call.1} parent=43 // pred_check_branch
          %530 = sbr.rel (%p528) target = $region48
        $region47: #{tpu_custom_call.1} parent=43 // pred_region
          %s531 = sand.u32 %s97, 1
          %s532 = scalar_lea.sflag [#allocation4], %s531
          %s533 = sand.u32 %s97, 1
          %s534 = smul.addr %s533, 64
          %s535 = scalar_lea.vmem [#allocation5], %s534
          %536 = dma.done %s532, 1024
        $region48: #{tpu_custom_call.1} parent=43 // pred_fallthru
          _
      $region44: #{tpu_custom_call.1} parent=5 // pred_fallthru
        _
    $region6: #{tpu_custom_call.1} parent=1 // loop_footer
      %s19 = sadd.s32 1, %s15
    $region7: #{tpu_custom_call.1} parent=1 // loop_footer_branch
      %14 = sbr.rel target = $region3
    $region8: #{tpu_custom_call.1} parent=1 // loop_exit
      _
    %537 = vsyncpa [#allocation3], 1
    %s538 = scalar_lea.sflag [#allocation3], 1
    %539 = vsyncpa %s538, 1
    %540 = vsyncpa [#allocation4], 1
    %s541 = scalar_lea.sflag [#allocation4], 1
    %542 = vsyncpa %s541, 1

</llo_original>
